<compile_context>
chip_gen: v6e
topology: v6e:2x2x1
jax: 0.10.0
libtpu: 0.0.40
codegen_flags: <defaults>
</compile_context>

<pallas_src>
import functools

import jax
import jax.numpy as jnp
from jax.experimental import pallas as pl
from jax.experimental.pallas import tpu as pltpu

_MIB = 1024 * 1024


# ------------------------------ helpers ------------------------------------- #
def _vmem_budget_bytes():
    """Usable VMEM budget, leaving headroom for compiler scratch/semaphores."""
    try:
        cap = pltpu.get_tpu_info().vmem_capacity_bytes
    except Exception:
        cap = 64 * _MIB  # conservative default (v7x per-TC physical size)
    return (int(cap) * 3) // 4  # ~48 MiB on v7x, ~96 MiB on v5e/v6e


def _pick_tiles(N, C, L, itemsize, budget):
    """Pick (TN, TL) for the two-pass path.

    TL is the largest multiple of 128 dividing L (capped at 8192) so the hot
    loops stay lane-dense; TN is grown until the double-buffered blocks plus
    the (C, TL) stats accumulators approach the VMEM budget.
    """
    if L % 128 == 0:
        tl, t = 128, 128
        while t <= min(L, 8192):
            if L % t == 0:
                tl = t
            t += 128
    else:
        # TODO(synk): pad L to a multiple of 128 and mask instead of using the
        # full (lane-sparse) extent for non-128-multiple feature maps.
        tl = L

    while True:
        acc_bytes = 2 * C * tl * 4  # stats-pass f32 accumulators
        for tn in sorted((d for d in range(1, N + 1) if N % d == 0),
                         reverse=True):
            blk = tn * C * tl * itemsize
            # pass 2: 2x in + 2x out double buffers; pass 1: 2x in + accums.
            need = max(4 * blk, 2 * blk + acc_bytes) + 2 * _MIB
            if blk <= 16 * _MIB and need <= budget:
                return tn, tl
        if tl % 256 == 0:
            tl //= 2
        elif tl > 128 and tl % 128 == 0:
            tl = 128
        else:
            return 1, tl  # last resort for pathological shapes


# ------------------------------ kernels ------------------------------------- #
def _fused_bn_kernel(x_ref, gamma_ref, beta_ref, o_ref, *, count, eps):
    """Single pass: x resident in VMEM -> stats + normalize, 1 read + 1 write."""
    inv_count = 1.0 / count
    x = x_ref[...].astype(jnp.float32)                       # (N, C, L)
    sum_cl = jnp.sum(x, axis=0)                              # (C, L) VALU adds
    mean = jnp.sum(sum_cl, axis=-1, keepdims=True) * inv_count       # (C, 1)
    d = x - mean[None]                                        # centered (stable)
    var = jnp.sum(jnp.sum(d * d, axis=0), axis=-1, keepdims=True) * inv_count
    inv_std = jax.lax.rsqrt(var + eps)                        # (C, 1)
    scale = gamma_ref[...] * inv_std                          # (C, 1)
    shift = beta_ref[...] - mean * scale                      # (C, 1)
    o_ref[...] = (x * scale[None] + shift[None]).astype(o_ref.dtype)


def _stats_kernel(x_ref, psum_ref, pssq_ref, acc_sum, acc_ssq):
    """Lane-dense per-channel sum / sum-of-squares accumulation.

    Per grid step: pure elementwise adds into (C, TL) f32 accumulators; the
    single cross-lane reduction happens only at the last l-step, writing one
    (C, 1) partial column per N-tile.
    """
    l_id = pl.program_id(1)

    @pl.when(l_id == 0)
    def _():
        acc_sum[...] = jnp.zeros_like(acc_sum)
        acc_ssq[...] = jnp.zeros_like(acc_ssq)

    x = x_ref[...].astype(jnp.float32)                        # (TN, C, TL)
    acc_sum[...] += jnp.sum(x, axis=0)                        # (C, TL)
    acc_ssq[...] += jnp.sum(x * x, axis=0)

    @pl.when(l_id == pl.num_programs(1) - 1)
    def _():
        psum_ref[...] = jnp.sum(acc_sum[...], axis=-1, keepdims=True)   # (C, 1)
        pssq_ref[...] = jnp.sum(acc_ssq[...], axis=-1, keepdims=True)


def _norm_kernel(x_ref, scale_ref, shift_ref, o_ref):
    """y = x * scale_c + shift_c, lane-dense elementwise tile."""
    o_ref[...] = (x_ref[...].astype(jnp.float32) * scale_ref[...]
                  + shift_ref[...]).astype(o_ref.dtype)


# ------------------------------ wrapper -------------------------------------- #
def switchable_batchnorm2d(x, weight, bias, index, eps=1e-5,
                           force_two_pass=False):
    """x: (N, C, H, W). weight/bias: (num_bns, C). index: python int switch."""
    N, C, H, W = x.shape
    num_bns = weight.shape[0]
    assert 0 <= index < num_bns
    L = H * W
    count = float(N * L)
    eps = float(eps)
    budget = _vmem_budget_bytes()
    itemsize = x.dtype.itemsize

    x3 = x.reshape(N, C, L)                      # contiguous reshape, no copy
    gamma = weight[index].astype(jnp.float32)    # static switch select, (C,)
    beta = bias[index].astype(jnp.float32)

    # ---------------- fused single-pass path (x fits in VMEM) ----------------
    x_f32_bytes = N * C * L * 4
    if not force_two_pass and (5 * x_f32_bytes + 2 * _MIB) <= budget:
        y3 = pl.pallas_call(
            functools.partial(_fused_bn_kernel, count=count, eps=eps),
            out_shape=jax.ShapeDtypeStruct((N, C, L), x.dtype),
            grid_spec=pl.GridSpec(
                grid=(1,),
                in_specs=[
                    pl.BlockSpec((N, C, L), lambda i: (0, 0, 0)),
                    pl.BlockSpec((C, 1), lambda i: (0, 0)),
                    pl.BlockSpec((C, 1), lambda i: (0, 0)),
                ],
                out_specs=pl.BlockSpec((N, C, L), lambda i: (0, 0, 0)),
            ),
            compiler_params=pltpu.CompilerParams(
                dimension_semantics=("arbitrary",),
                vmem_limit_bytes=budget),
            cost_estimate=pl.CostEstimate(
                flops=7 * N * C * L,
                transcendentals=C,
                bytes_accessed=2 * itemsize * N * C * L + 8 * C),
        )(x3, gamma.reshape(C, 1), beta.reshape(C, 1))
        return y3.reshape(N, C, H, W)

    # ------------------------- two-pass (large x) ----------------------------
    TN, TL = _pick_tiles(N, C, L, itemsize, budget)
    n_tiles, l_tiles = N // TN, L // TL

    # pass 1: lane-dense partial sums per N-tile; finalize done in the wrapper.
    psum, pssq = pl.pallas_call(
        _stats_kernel,
        out_shape=(jax.ShapeDtypeStruct((C, n_tiles), jnp.float32),
                   jax.ShapeDtypeStruct((C, n_tiles), jnp.float32)),
        grid_spec=pltpu.PrefetchScalarGridSpec(
            num_scalar_prefetch=0,
            grid=(n_tiles, l_tiles),
            in_specs=[pl.BlockSpec((TN, C, TL), lambda n, l: (n, 0, l))],
            out_specs=[pl.BlockSpec((C, 1), lambda n, l: (0, n)),
                       pl.BlockSpec((C, 1), lambda n, l: (0, n))],
            scratch_shapes=[pltpu.VMEM((C, TL), jnp.float32),
                            pltpu.VMEM((C, TL), jnp.float32)],
        ),
        compiler_params=pltpu.CompilerParams(
            dimension_semantics=("parallel", "arbitrary"),
            vmem_limit_bytes=budget),
        cost_estimate=pl.CostEstimate(
            flops=3 * N * C * L,
            transcendentals=0,
            bytes_accessed=itemsize * N * C * L + 8 * C * n_tiles),
    )(x3)

    # Tiny C-sized finalize (mean/var/rsqrt + switch affine) in the wrapper.
    inv_count = 1.0 / count
    sum_c = jnp.sum(psum, axis=1)
    ssq_c = jnp.sum(pssq, axis=1)
    mean = sum_c * inv_count
    var = jnp.maximum(ssq_c * inv_count - mean * mean, 0.0)  # biased, as in BN
    inv_std = jax.lax.rsqrt(var + eps)
    scale = gamma * inv_std
    shift = beta - mean * scale

    # pass 2: elementwise normalization, fully parallel (megacore) grid.
    y3 = pl.pallas_call(
        _norm_kernel,
        out_shape=jax.ShapeDtypeStruct((N, C, L), x.dtype),
        grid_spec=pl.GridSpec(
            grid=(n_tiles, l_tiles),
            in_specs=[
                pl.BlockSpec((TN, C, TL), lambda n, l: (n, 0, l)),
                pl.BlockSpec((1, C, 1), lambda n, l: (0, 0, 0)),
                pl.BlockSpec((1, C, 1), lambda n, l: (0, 0, 0)),
            ],
            out_specs=pl.BlockSpec((TN, C, TL), lambda n, l: (n, 0, l)),
        ),
        compiler_params=pltpu.CompilerParams(
            dimension_semantics=("parallel", "parallel"),
            vmem_limit_bytes=budget),
        cost_estimate=pl.CostEstimate(
            flops=2 * N * C * L,
            transcendentals=0,
            bytes_accessed=2 * itemsize * N * C * L + 8 * C),
    )(x3, scale.reshape(1, C, 1), shift.reshape(1, C, 1))

    return y3.reshape(N, C, H, W)


# ------------------------------ reference ------------------------------------ #
def _reference(x, weight, bias, index, eps=1e-5):
    w = weight[index].reshape(1, -1, 1, 1)
    b = bias[index].reshape(1, -1, 1, 1)
    mean = jnp.mean(x, axis=(0, 2, 3), keepdims=True)
    var = jnp.var(x, axis=(0, 2, 3), keepdims=True)   # biased, like BN training
    return (x - mean) * jax.lax.rsqrt(var + eps) * w + b


# --------------------------------- main --------------------------------------- #
if __name__ == "__main__":
    key = jax.random.PRNGKey(0)
    batch, max_num_features, H, W = 2, 8, 16, 16
    num_bns, index = 3, 1

    kx, kg, kb = jax.random.split(key, 3)
    x = jax.random.normal(kx, (batch, max_num_features, H, W), dtype=jnp.float32)
    # per-switch private BN affine params (module inits gamma=1, beta=0; random
    # values exercise the same formula more strictly)
    weight = 1.0 + 0.1 * jax.random.normal(
        kg, (num_bns, max_num_features), dtype=jnp.float32)
    bias = 0.1 * jax.random.normal(
        kb, (num_bns, max_num_features), dtype=jnp.float32)

    ref = _reference(x, weight, bias, index)

    # fused single-pass path (small x -> resident in VMEM)
    out_fused = jax.block_until_ready(
        switchable_batchnorm2d(x, weight, bias, index))
    assert out_fused.shape == x.shape, out_fused.shape
    assert jnp.allclose(out_fused, ref, rtol=1e-3, atol=1e-3), "fused mismatch"

    # tiled two-pass path (used for large x); exercised here for coverage
    out_2p = jax.block_until_ready(
        switchable_batchnorm2d(x, weight, bias, index, force_two_pass=True))
    assert jnp.allclose(out_2p, ref, rtol=1e-3, atol=1e-3), "two-pass mismatch"

    print("KERNEL_OK")
</pallas_src>

<mosaic_0001>
module attributes {stable_mosaic.version = 11 : i64} {
  func.func @_fused_bn_kernel(%arg0: i32, %arg1: memref<2x8x256xf32, #tpu.memory_space<vmem>>, %arg2: memref<8x1xf32, #tpu.memory_space<vmem>>, %arg3: memref<8x1xf32, #tpu.memory_space<vmem>>, %arg4: memref<2x8x256xf32, #tpu.memory_space<vmem>>) attributes {dimension_semantics = [#tpu.dimension_semantics<arbitrary>], iteration_bounds = array<i64: 1>, scalar_prefetch = 0 : i64, scratch_operands = 0 : i64, tpu.core_type = #tpu.core_type<tc>, window_params = [{pipeline_mode = #tpu.pipeline_mode<synchronous>, transform_indices = @transform_0, window_bounds = array<i64: 2, 8, 256>}, {pipeline_mode = #tpu.pipeline_mode<synchronous>, transform_indices = @transform_1, window_bounds = array<i64: 8, 1>}, {pipeline_mode = #tpu.pipeline_mode<synchronous>, transform_indices = @transform_2, window_bounds = array<i64: 8, 1>}, {pipeline_mode = #tpu.pipeline_mode<synchronous>, transform_indices = @transform_3, window_bounds = array<i64: 2, 8, 256>}]} {
    %c0 = arith.constant 0 : index
    %c0_0 = arith.constant 0 : index
    %c0_1 = arith.constant 0 : index
    %0 = vector.load %arg1[%c0, %c0_0, %c0_1] : memref<2x8x256xf32, #tpu.memory_space<vmem>>, vector<2x8x256xf32>
    %cst = arith.constant dense<0.000000e+00> : vector<8x256xf32>
    %1 = vector.multi_reduction <add>, %0, %cst [0] : vector<2x8x256xf32> to vector<8x256xf32>
    %cst_2 = arith.constant dense<0.000000e+00> : vector<8xf32>
    %2 = vector.multi_reduction <add>, %1, %cst_2 [1] : vector<8x256xf32> to vector<8xf32>
    %3 = vector.shape_cast %2 : vector<8xf32> to vector<8x1xf32>
    %cst_3 = arith.constant 0.001953125 : f32
    %4 = vector.broadcast %cst_3 : f32 to vector<8x1xf32>
    %5 = arith.mulf %3, %4 : vector<8x1xf32>
    %6 = vector.shape_cast %5 : vector<8x1xf32> to vector<1x8x1xf32>
    %7 = vector.broadcast %6 : vector<1x8x1xf32> to vector<2x8x256xf32>
    %8 = arith.subf %0, %7 : vector<2x8x256xf32>
    %9 = arith.mulf %8, %8 : vector<2x8x256xf32>
    %cst_4 = arith.constant dense<0.000000e+00> : vector<8x256xf32>
    %10 = vector.multi_reduction <add>, %9, %cst_4 [0] : vector<2x8x256xf32> to vector<8x256xf32>
    %cst_5 = arith.constant dense<0.000000e+00> : vector<8xf32>
    %11 = vector.multi_reduction <add>, %10, %cst_5 [1] : vector<8x256xf32> to vector<8xf32>
    %12 = vector.shape_cast %11 : vector<8xf32> to vector<8x1xf32>
    %cst_6 = arith.constant 0.001953125 : f32
    %13 = vector.broadcast %cst_6 : f32 to vector<8x1xf32>
    %14 = arith.mulf %12, %13 : vector<8x1xf32>
    %cst_7 = arith.constant 9.99999974E-6 : f32
    %15 = vector.broadcast %cst_7 : f32 to vector<8x1xf32>
    %16 = arith.addf %14, %15 : vector<8x1xf32>
    %17 = math.rsqrt %16 : vector<8x1xf32>
    %c0_8 = arith.constant 0 : index
    %c0_9 = arith.constant 0 : index
    %18 = vector.load %arg2[%c0_8, %c0_9] : memref<8x1xf32, #tpu.memory_space<vmem>>, vector<8x1xf32>
    %19 = arith.mulf %18, %17 : vector<8x1xf32>
    %c0_10 = arith.constant 0 : index
    %c0_11 = arith.constant 0 : index
    %20 = vector.load %arg3[%c0_10, %c0_11] : memref<8x1xf32, #tpu.memory_space<vmem>>, vector<8x1xf32>
    %21 = arith.mulf %5, %19 : vector<8x1xf32>
    %22 = arith.subf %20, %21 : vector<8x1xf32>
    %23 = vector.shape_cast %19 : vector<8x1xf32> to vector<1x8x1xf32>
    %24 = vector.broadcast %23 : vector<1x8x1xf32> to vector<2x8x256xf32>
    %25 = arith.mulf %0, %24 : vector<2x8x256xf32>
    %26 = vector.shape_cast %22 : vector<8x1xf32> to vector<1x8x1xf32>
    %27 = vector.broadcast %26 : vector<1x8x1xf32> to vector<2x8x256xf32>
    %28 = arith.addf %25, %27 : vector<2x8x256xf32>
    %c0_12 = arith.constant 0 : index
    %c0_13 = arith.constant 0 : index
    %c0_14 = arith.constant 0 : index
    %29 = vector.load %arg4[%c0_12, %c0_13, %c0_14] : memref<2x8x256xf32, #tpu.memory_space<vmem>>, vector<2x8x256xf32>
    tpu.vector_store %arg4[%c0_12, %c0_13, %c0_14], %28 {strides = array<i32>} : memref<2x8x256xf32, #tpu.memory_space<vmem>>, vector<2x8x256xf32>,
    return
  }
  func.func @transform_0(%arg0: i32) -> (i32, i32, i32) {
    %c0_i32 = arith.constant 0 : i32
    %c0_i32_0 = arith.constant 0 : i32
    %c0_i32_1 = arith.constant 0 : i32
    %c0_i32_2 = arith.constant 0 : i32
    return %c0_i32, %c0_i32_0, %c0_i32_1 : i32, i32, i32
  }
  func.func @transform_1(%arg0: i32) -> (i32, i32) {
    %c0_i32 = arith.constant 0 : i32
    %c0_i32_0 = arith.constant 0 : i32
    %c0_i32_1 = arith.constant 0 : i32
    return %c0_i32, %c0_i32_0 : i32, i32
  }
  func.func @transform_2(%arg0: i32) -> (i32, i32) {
    %c0_i32 = arith.constant 0 : i32
    %c0_i32_0 = arith.constant 0 : i32
    %c0_i32_1 = arith.constant 0 : i32
    return %c0_i32, %c0_i32_0 : i32, i32
  }
  func.func @transform_3(%arg0: i32) -> (i32, i32, i32) {
    %c0_i32 = arith.constant 0 : i32
    %c0_i32_0 = arith.constant 0 : i32
    %c0_i32_1 = arith.constant 0 : i32
    %c0_i32_2 = arith.constant 0 : i32
    return %c0_i32, %c0_i32_0, %c0_i32_1 : i32, i32, i32
  }
}

</mosaic_0001>

<llo_original>
// kernel: tpu_custom_call.1
$region0: #{tpu_custom_call.1}
  #allocation0 [shape = 'u32[]', space=smem, size = 0x4, offset = 0x4, fixed_abs, tag = 'smem constant byte address 0x4 - core index']
  #allocation1 [shape = 'u32[144,128]{1,0:T(1,128)}', space=vmem, size = 0x12000, scoped, tag = 'internal scratch']
  %s0 = inlined_call_operand.hbm [shape: f32[2,8,256], index: 0, kind: input, shape index: {}]
  %s1 = inlined_call_operand.vmem [shape: f32[8,1], index: 1, kind: input, shape index: {}]
  %s2 = inlined_call_operand.vmem [shape: f32[8,1], index: 2, kind: input, shape index: {}]
  %s3 = inlined_call_operand.hbm [shape: f32[2,8,256], index: 3, kind: output, shape index: {}]
  %s4 = sld [smem:[#allocation0]]
  $region26: #{tpu_custom_call.1} parent=0
    _
  %s6 = ssub.s32 1, %s4
  %s7 = scalar_select 0, %s6, %s4
  $region1: #{tpu_custom_call.1} parent=0
    #allocation2 [shape = 'u8[16384]{0}', space=vmem, size = 0x4000, scoped, tag = 'input window, operand 0, single buffered']
    #allocation3 [shape = 's32[1]{0}', space=sflag, size = 0x4, scoped, tag = 'scoped memory for tpu_custom_call.1']
    #allocation4 [shape = 's32[1]{0}', space=sflag, size = 0x4, scoped, tag = 'scoped memory for tpu_custom_call.1']
    #allocation5 [shape = 'u8[16384]{0}', space=vmem, size = 0x4000, scoped, tag = 'output window, operand 0, single buffered']
    %8 = vsyncpa [#allocation3], 0
    %9 = vsyncpa [#allocation4], 0
    // Predicated region
    $region2: #{tpu_custom_call.1} parent=1 // pred_check
      _
    $region3: #{tpu_custom_call.1} parent=1 // pred_check_branch
      %11 = sbr.rel (0) target = $region5
    $region4: #{tpu_custom_call.1} parent=1 // pred_region
      %s13 = ssub.s32 512, 512
      %14 = vsyncadd [#allocation3], %s13
      %s15 = sshll.u32 [#allocation2], 4
      %s16 = int_to_ptr.vmem [resolvable:$true] %s15
      %21 = dma.hbm_to_vmem [thread:$0]  %s0, 512, %s16, [#allocation3], 256, 256, 16
    $region5: #{tpu_custom_call.1} parent=1 // pred_fallthru
      _
    // Predicated region
    $region6: #{tpu_custom_call.1} parent=1 // pred_check
      _
    $region7: #{tpu_custom_call.1} parent=1 // pred_check_branch
      %23 = sbr.rel (0) target = $region9
    $region8: #{tpu_custom_call.1} parent=1 // pred_region
      _
    $region9: #{tpu_custom_call.1} parent=1 // pred_fallthru
      _
    // Predicated region
    $region10: #{tpu_custom_call.1} parent=1 // pred_check
      _
    $region11: #{tpu_custom_call.1} parent=1 // pred_check_branch
      %25 = sbr.rel (0) target = $region13
    $region12: #{tpu_custom_call.1} parent=1 // pred_region
      _
    $region13: #{tpu_custom_call.1} parent=1 // pred_fallthru
      _
    // Predicated region
    $region14: #{tpu_custom_call.1} parent=1 // pred_check
      _
    $region15: #{tpu_custom_call.1} parent=1 // pred_check_branch
      %27 = sbr.rel (0) target = $region17
    $region16: #{tpu_custom_call.1} parent=1 // pred_region
      %28 = dma.done [#allocation3], 512
    $region17: #{tpu_custom_call.1} parent=1 // pred_fallthru
      _
    %v29 = vld [vmem:[#allocation2] sm:$0xff]
    %v30 = vld [vmem:[#allocation2 + $0x8] sm:$0xff]
    %v31 = vld [vmem:[#allocation2 + $0x10] sm:$0xff]
    %v32 = vld [vmem:[#allocation2 + $0x18] sm:$0xff]
    %v33 = vadd.f32 %v29, %v31
    %v34 = vadd.f32 %v30, %v32
    %v35 = vadd.f32 %v33, %v34
    %36 = vadd.xlane.f32.xlu0 %v35
    %v37 = vpop.xlane.xlu0 %36
    %v38 = vmul.f32 %v37, 0.001953125
    %v39 = vsub.f32 %v29, %v38
    %v40 = vsub.f32 %v30, %v38
    %v41 = vsub.f32 %v31, %v38
    %v42 = vsub.f32 %v32, %v38
    %v43 = vmul.f32 %v39, %v39
    %v44 = vmul.f32 %v40, %v40
    %v45 = vmul.f32 %v41, %v41
    %v46 = vmul.f32 %v42, %v42
    %v47 = vadd.f32 %v43, %v45
    %v48 = vadd.f32 %v44, %v46
    %v49 = vadd.f32 %v47, %v48
    %50 = vadd.xlane.f32.xlu0 %v49
    %v51 = vpop.xlane.xlu0 %50
    %v52 = vmul.f32 %v51, 0.001953125
    %v53 = vadd.f32 %v52, 1e-05
    %v54 = vrsqrt.pop %v53
    %v55 = vld [vmem:[%s1] sm:$0xff]
    %v56 = vmul.f32 %v55, %v54
    %v57 = vld [vmem:[%s2] sm:$0xff]
    %v58 = vmul.f32 %v38, %v56
    %v59 = vsub.f32 %v57, %v58
    %61 = vset.pattern.permute.xlu0 0
    %62 = vperm.xlu0 %61, %v56
    %v63 = vpop.permute.xlu0 %62
    %v65 = vmul.f32 %v29, %v63
    %v66 = vmul.f32 %v30, %v63
    %v67 = vmul.f32 %v31, %v63
    %v68 = vmul.f32 %v32, %v63
    %70 = vset.pattern.permute.xlu0 0
    %71 = vperm.xlu0 %70, %v59
    %v72 = vpop.permute.xlu0 %71
    %v74 = vadd.f32 %v65, %v72
    %v75 = vadd.f32 %v66, %v72
    %v76 = vadd.f32 %v67, %v72
    %v77 = vadd.f32 %v68, %v72
    %78 = vst [vmem:[#allocation5] sm:$0xff] %v74
    %79 = vst [vmem:[#allocation5 + $0x8] sm:$0xff] %v75
    %80 = vst [vmem:[#allocation5 + $0x10] sm:$0xff] %v76
    %81 = vst [vmem:[#allocation5 + $0x18] sm:$0xff] %v77
    // Predicated region
    $region18: #{tpu_custom_call.1} parent=1 // pred_check
      _
    $region19: #{tpu_custom_call.1} parent=1 // pred_check_branch
      %83 = sbr.rel (0) target = $region21
    $region20: #{tpu_custom_call.1} parent=1 // pred_region
      %s85 = ssub.s32 512, 512
      %86 = vsyncadd [#allocation4], %s85
      %s87 = sshll.u32 [#allocation5], 4
      %s88 = int_to_ptr.vmem [resolvable:$true] %s87
      %93 = dma.vmem_to_hbm [thread:$0]  %s88, 512, %s3, [#allocation4], 256, 256, 16
    $region21: #{tpu_custom_call.1} parent=1 // pred_fallthru
      _
    // Predicated region
    $region22: #{tpu_custom_call.1} parent=1 // pred_check
      _
    $region23: #{tpu_custom_call.1} parent=1 // pred_check_branch
      %95 = sbr.rel (0) target = $region25
    $region24: #{tpu_custom_call.1} parent=1 // pred_region
      %96 = dma.done [#allocation4], 512
    $region25: #{tpu_custom_call.1} parent=1 // pred_fallthru
      _
    %97 = vsyncpa [#allocation3], 1
    %98 = vsyncpa [#allocation4], 1

</llo_original>
